<compile_context>
chip_gen: v7x
topology: tpu7x:2x2x1
jax: 0.10.0
libtpu: 0.0.40
codegen_flags: <defaults>
</compile_context>

<pallas_src>
import functools

import jax
import jax.numpy as jnp
from jax.experimental import pallas as pl
from jax.experimental.pallas import tpu as pltpu


# ---------------------------------------------------------------------------
# Kernel 1: logits = x @ W + b, tiled over (V, K).  Grid = (nv, nk).
# The V axis is "parallel" (megacore / dual TC stream disjoint weight
# columns); the K axis is the reduction.  The (B, tv) f32 output tile is
# resident across k and used directly as the accumulator.
# ---------------------------------------------------------------------------
def _logits_kernel(x_ref, w_ref, b_ref, o_ref, *, tk):
    # x_ref: (B, F)  bf16, resident (constant index_map)
    # w_ref: (tk,tv) bf16 weight slab        b_ref: (1, tv) f32
    # o_ref: (B, tv) f32, resident across k
    k = pl.program_id(1)

    start = k * tk
    if tk % 128 == 0:
        start = pl.multiple_of(start, 128)
    xk = x_ref[:, pl.ds(start, tk)]

    part = jnp.dot(xk, w_ref[...], preferred_element_type=jnp.float32)

    @pl.when(k == 0)
    def _init():
        o_ref[...] = part + b_ref[...]

    @pl.when(k > 0)
    def _accum():
        o_ref[...] += part


# ---------------------------------------------------------------------------
# Kernel 2: row softmax over the vocab axis (PyTorch Softmax(dim=1) after
# flatten).  O(B*V) second pass; kept separate so the logits kernel can split
# V across cores without a cross-tile softmax combine.
# ---------------------------------------------------------------------------
def _softmax_kernel(l_ref, o_ref):
    logits = l_ref[...]
    m = jnp.max(logits, axis=-1, keepdims=True)
    e = jnp.exp(logits - m)
    denom = jnp.sum(e, axis=-1, keepdims=True)
    # Exact division (not approx reciprocal) so rows sum to 1 to f32 accuracy.
    o_ref[...] = (e / denom).astype(o_ref.dtype)


def _vmem_capacity_bytes() -> int:
    try:
        return int(pltpu.get_tpu_info().vmem_capacity_bytes)
    except Exception:
        return 64 << 20  # assume the smallest generation (v7x) if query fails


def _largest_aligned_divisor(n: int, cap: int) -> int:
    """Largest multiple of 128 that divides n and is <= cap; else n itself."""
    t = (min(cap, n) // 128) * 128
    while t >= 128:
        if n % t == 0:
            return t
        t -= 128
    return n  # handles n < 128 or n not factorable into 128-multiples


@functools.partial(jax.jit, static_argnames=("tk", "tv"))
def token_classifier(x, weight_t, bias, tk: int | None = None, tv: int | None = None):
    """softmax(flatten(x, 1) @ weight_t + bias, axis=1).

    x        : (B, max_len, d_model)
    weight_t : (F, V)  -- PyTorch Linear weight (V, F) stored transposed;
               ideally pre-cast to bf16 once at model init (not per call).
    bias     : (V,)
    """
    B = x.shape[0]
    F = x.shape[1] * x.shape[2]
    V = weight_t.shape[1]
    assert weight_t.shape[0] == F and bias.shape == (V,)

    vmem_cap = _vmem_capacity_bytes()
    budget = int(vmem_cap * 0.7)

    # Vocab tile: multiple of 128 dividing V (enables the parallel V axis and
    # keeps the output store lane-dense); fall back to V for odd/small vocabs.
    if tv is None:
        tv = _largest_aligned_divisor(V, 2048)
    assert V % tv == 0, "vocab tile must divide V"

    # K tile: MiB-scale weight slabs to amortize the ~0.35us per-step overhead,
    # capped so the double-buffered bf16 tile + residents fit the VMEM budget.
    if tk is None:
        resident = B * F * 2 + 2 * (B * tv * 4) + 2 * (tv * 4) + (1 << 20)
        w_budget = max(budget - resident, 2 << 20)
        rows_budget = max(128, w_budget // (2 * tv * 2))   # 2x double buffer, bf16
        rows_target = max(128, (4 << 20) // (tv * 2))      # ~4 MiB tile target
        tk = _largest_aligned_divisor(F, min(rows_budget, rows_target))
    assert F % tk == 0, "reduction tile must divide F"

    nv, nk = V // tv, F // tk

    # Activations are tiny -> cast per call is fine; the (F, V) weight should
    # already be bf16 (cast once outside; per-call casting doubles HBM traffic
    # on this weight-bound kernel).
    x_flat = x.reshape(B, F).astype(jnp.bfloat16)          # torch.flatten(input, 1)
    w = weight_t if weight_t.dtype == jnp.bfloat16 else weight_t.astype(jnp.bfloat16)
    bias2d = bias.reshape(1, V).astype(jnp.float32)

    need = (2 * tk * tv * 2        # double-buffered W tile (bf16)
            + B * F * 2            # resident x (bf16)
            + 2 * B * tv * 4       # double-buffered logits tile (f32)
            + 2 * tv * 4           # bias tile
            + (2 << 20))           # slack for compiler scratch
    vmem_limit = int(min(max(need, 8 << 20), int(vmem_cap * 0.85)))

    logits = pl.pallas_call(
        functools.partial(_logits_kernel, tk=tk),
        out_shape=jax.ShapeDtypeStruct((B, V), jnp.float32),
        grid_spec=pltpu.PrefetchScalarGridSpec(
            num_scalar_prefetch=0,
            grid=(nv, nk),                                    # (parallel V, reduction K)
            in_specs=[
                pl.BlockSpec((B, F), lambda j, k: (0, 0)),    # x resident in VMEM
                pl.BlockSpec((tk, tv), lambda j, k: (k, j)),  # W (K, V) slab
                pl.BlockSpec((1, tv), lambda j, k: (0, j)),   # bias V slab
            ],
            out_specs=pl.BlockSpec((B, tv), lambda j, k: (0, j)),  # resident across k
        ),
        compiler_params=pltpu.CompilerParams(
            dimension_semantics=("parallel", "arbitrary"),
            vmem_limit_bytes=vmem_limit,
        ),
        cost_estimate=pl.CostEstimate(
            flops=2 * B * F * V,
            transcendentals=0,
            bytes_accessed=F * V * 2 + B * F * 2 + B * V * 4 + V * 4,
        ),
    )(x_flat, w, bias2d)

    # Trivial second pass: row softmax over the full vocab axis.
    probs = pl.pallas_call(
        _softmax_kernel,
        out_shape=jax.ShapeDtypeStruct((B, V), jnp.float32),
        grid_spec=pltpu.PrefetchScalarGridSpec(
            num_scalar_prefetch=0,
            grid=(1,),
            in_specs=[pl.BlockSpec((B, V), lambda i: (0, 0))],
            out_specs=pl.BlockSpec((B, V), lambda i: (0, 0)),
        ),
        compiler_params=pltpu.CompilerParams(
            dimension_semantics=("arbitrary",),
        ),
        cost_estimate=pl.CostEstimate(
            flops=3 * B * V, transcendentals=B * V, bytes_accessed=2 * B * V * 4),
    )(logits)
    # TODO(synk): on v5e/v6e an int8-weight (or fp8 on v7x) MXU path would halve
    # HBM traffic again; left at bf16 to keep numerics close to the f32 module.
    return probs


if __name__ == "__main__":
    # Small shapes consistent with the module.
    B, max_len, d_model, vocab_size = 2, 8, 32, 128
    F = max_len * d_model

    key = jax.random.PRNGKey(0)
    kx, kw, kb = jax.random.split(key, 3)

    x = jax.random.normal(kx, (B, max_len, d_model), dtype=jnp.float32)
    # PyTorch Linear weight is (vocab, F); store it transposed as (F, vocab).
    weight_t = (jax.random.normal(kw, (F, vocab_size), dtype=jnp.float32)
                * (1.0 / jnp.sqrt(F)))
    bias = jax.random.normal(kb, (vocab_size,), dtype=jnp.float32) * 0.01

    # Pre-cast the weight to bf16 ONCE ("model init"), not per forward call.
    weight_t_bf16 = weight_t.astype(jnp.bfloat16)

    out = token_classifier(x, weight_t_bf16, bias)
    out = jax.block_until_ready(out)

    # Pure-JAX reference with matching bf16 rounding of the streamed operands.
    xb = x.reshape(B, F).astype(jnp.bfloat16).astype(jnp.float32)
    wb = weight_t_bf16.astype(jnp.float32)
    ref = jax.nn.softmax(xb @ wb + bias, axis=-1)

    assert out.shape == (B, vocab_size)
    assert jnp.allclose(out, ref, atol=2e-3, rtol=2e-3), "mismatch vs reference"
    assert jnp.allclose(jnp.sum(out, axis=-1), 1.0, atol=1e-3), "rows must sum to 1"

    print("KERNEL_OK")
</pallas_src>

<mosaic_0001>
module attributes {stable_mosaic.version = 11 : i64} {
  func.func @_logits_kernel(%arg0: i32, %arg1: i32, %arg2: memref<2x256xbf16, #tpu.memory_space<vmem>>, %arg3: memref<256x128xbf16, #tpu.memory_space<vmem>>, %arg4: memref<1x128xf32, #tpu.memory_space<vmem>>, %arg5: memref<2x128xf32, #tpu.memory_space<vmem>>) attributes {dimension_semantics = [#tpu.dimension_semantics<parallel>, #tpu.dimension_semantics<arbitrary>], iteration_bounds = array<i64: 1, 1>, scalar_prefetch = 0 : i64, scratch_operands = 0 : i64, tpu.core_type = #tpu.core_type<tc>, window_params = [{pipeline_mode = #tpu.pipeline_mode<synchronous>, transform_indices = @transform_0, window_bounds = array<i64: 2, 256>}, {transform_indices = @transform_1, window_bounds = array<i64: 256, 128>}, {transform_indices = @transform_2, window_bounds = array<i64: 1, 128>}, {transform_indices = @transform_3, window_bounds = array<i64: 2, 128>}]} {
    %c256_i32 = arith.constant 256 : i32
    %0 = arith.muli %arg1, %c256_i32 : i32
    %1 = tpu.assume_multiple %0, 128 : i32
    %c0 = arith.constant 0 : index
    %2 = arith.index_cast %1 : i32 to index
    %3 = vector.load %arg2[%c0, %2] : memref<2x256xbf16, #tpu.memory_space<vmem>>, vector<2x256xbf16>
    %c0_0 = arith.constant 0 : index
    %c0_1 = arith.constant 0 : index
    %4 = vector.load %arg3[%c0_0, %c0_1] : memref<256x128xbf16, #tpu.memory_space<vmem>>, vector<256x128xbf16>
    %cst = arith.constant dense<0.000000e+00> : vector<2x128xf32>
    %5 = tpu.matmul %3, %4, %cst {dimension_numbers = #tpu.dot_dimension_numbers<[1], [0], [0], [1], [0, 0, 1, 1], [], []>} : vector<2x256xbf16>, vector<256x128xbf16>, vector<2x128xf32> -> vector<2x128xf32>
    %c0_i32 = arith.constant 0 : i32
    %6 = arith.cmpi eq, %arg1, %c0_i32 : i32
    %7 = arith.extui %6 : i1 to i32
    %c0_i32_2 = arith.constant 0 : i32
    %8 = arith.cmpi ne, %7, %c0_i32_2 : i32
    scf.if %8 {
      %c0_5 = arith.constant 0 : index
      %c0_6 = arith.constant 0 : index
      %12 = vector.load %arg4[%c0_5, %c0_6] : memref<1x128xf32, #tpu.memory_space<vmem>>, vector<1x128xf32>
      %13 = vector.broadcast %12 : vector<1x128xf32> to vector<2x128xf32>
      %14 = arith.addf %5, %13 : vector<2x128xf32>
      %c0_7 = arith.constant 0 : index
      %c0_8 = arith.constant 0 : index
      %15 = vector.load %arg5[%c0_7, %c0_8] : memref<2x128xf32, #tpu.memory_space<vmem>>, vector<2x128xf32>
      tpu.vector_store %arg5[%c0_7, %c0_8], %14 {strides = array<i32>} : memref<2x128xf32, #tpu.memory_space<vmem>>, vector<2x128xf32>,
    } else {
    }
    %c0_i32_3 = arith.constant 0 : i32
    %9 = arith.cmpi sgt, %arg1, %c0_i32_3 : i32
    %10 = arith.extui %9 : i1 to i32
    %c0_i32_4 = arith.constant 0 : i32
    %11 = arith.cmpi ne, %10, %c0_i32_4 : i32
    scf.if %11 {
      %c0_5 = arith.constant 0 : index
      %c0_6 = arith.constant 0 : index
      %12 = vector.load %arg5[%c0_5, %c0_6] : memref<2x128xf32, #tpu.memory_space<vmem>>, vector<2x128xf32>
      %13 = arith.addf %12, %5 : vector<2x128xf32>
      %c0_7 = arith.constant 0 : index
      %c0_8 = arith.constant 0 : index
      %14 = vector.load %arg5[%c0_7, %c0_8] : memref<2x128xf32, #tpu.memory_space<vmem>>, vector<2x128xf32>
      tpu.vector_store %arg5[%c0_7, %c0_8], %13 {strides = array<i32>} : memref<2x128xf32, #tpu.memory_space<vmem>>, vector<2x128xf32>,
    } else {
    }
    return
  }
  func.func @transform_0(%arg0: i32, %arg1: i32) -> (i32, i32) {
    %c0_i32 = arith.constant 0 : i32
    %c0_i32_0 = arith.constant 0 : i32
    %c0_i32_1 = arith.constant 0 : i32
    return %c0_i32, %c0_i32_0 : i32, i32
  }
  func.func @transform_1(%arg0: i32, %arg1: i32) -> (i32, i32) {
    %c0_i32 = arith.constant 0 : i32
    return %arg1, %arg0 : i32, i32
  }
  func.func @transform_2(%arg0: i32, %arg1: i32) -> (i32, i32) {
    %c0_i32 = arith.constant 0 : i32
    %c0_i32_0 = arith.constant 0 : i32
    return %c0_i32, %arg0 : i32, i32
  }
  func.func @transform_3(%arg0: i32, %arg1: i32) -> (i32, i32) {
    %c0_i32 = arith.constant 0 : i32
    %c0_i32_0 = arith.constant 0 : i32
    return %c0_i32, %arg0 : i32, i32
  }
}

module attributes {stable_mosaic.version = 11 : i64} {
  func.func @_softmax_kernel(%arg0: i32, %arg1: memref<2x128xf32, #tpu.memory_space<vmem>>, %arg2: memref<2x128xf32, #tpu.memory_space<vmem>>) attributes {dimension_semantics = [#tpu.dimension_semantics<arbitrary>], iteration_bounds = array<i64: 1>, scalar_prefetch = 0 : i64, scratch_operands = 0 : i64, tpu.core_type = #tpu.core_type<tc>, window_params = [{pipeline_mode = #tpu.pipeline_mode<synchronous>, transform_indices = @transform_0, window_bounds = array<i64: 2, 128>}, {pipeline_mode = #tpu.pipeline_mode<synchronous>, transform_indices = @transform_1, window_bounds = array<i64: 2, 128>}]} {
    %c0 = arith.constant 0 : index
    %c0_0 = arith.constant 0 : index
    %0 = vector.load %arg1[%c0, %c0_0] : memref<2x128xf32, #tpu.memory_space<vmem>>, vector<2x128xf32>
    %cst = arith.constant dense<0xFF800000> : vector<2xf32>
    %1 = vector.multi_reduction <maximumf>, %0, %cst [1] : vector<2x128xf32> to vector<2xf32>
    %2 = vector.shape_cast %1 : vector<2xf32> to vector<2x1xf32>
    %3 = vector.broadcast %2 : vector<2x1xf32> to vector<2x128xf32>
    %4 = arith.subf %0, %3 : vector<2x128xf32>
    %5 = math.exp %4 : vector<2x128xf32>
    %cst_1 = arith.constant dense<0.000000e+00> : vector<2xf32>
    %6 = vector.multi_reduction <add>, %5, %cst_1 [1] : vector<2x128xf32> to vector<2xf32>
    %7 = vector.shape_cast %6 : vector<2xf32> to vector<2x1xf32>
    %8 = vector.broadcast %7 : vector<2x1xf32> to vector<2x128xf32>
    %9 = arith.divf %5, %8 : vector<2x128xf32>
    %c0_2 = arith.constant 0 : index
    %c0_3 = arith.constant 0 : index
    %10 = vector.load %arg2[%c0_2, %c0_3] : memref<2x128xf32, #tpu.memory_space<vmem>>, vector<2x128xf32>
    tpu.vector_store %arg2[%c0_2, %c0_3], %9 {strides = array<i32>} : memref<2x128xf32, #tpu.memory_space<vmem>>, vector<2x128xf32>,
    return
  }
  func.func @transform_0(%arg0: i32) -> (i32, i32) {
    %c0_i32 = arith.constant 0 : i32
    %c0_i32_0 = arith.constant 0 : i32
    %c0_i32_1 = arith.constant 0 : i32
    return %c0_i32, %c0_i32_0 : i32, i32
  }
  func.func @transform_1(%arg0: i32) -> (i32, i32) {
    %c0_i32 = arith.constant 0 : i32
    %c0_i32_0 = arith.constant 0 : i32
    %c0_i32_1 = arith.constant 0 : i32
    return %c0_i32, %c0_i32_0 : i32, i32
  }
}

</mosaic_0001>

<llo_original>
// kernel: token_classifier.3
$region0: #{token_classifier.3}
  #allocation0 [shape = 'u32[]', space=smem, size = 0x4, offset = 0x4, fixed_abs, tag = 'smem constant byte address 0x4 - core index']
  #allocation1 [shape = 'u32[144,128]{1,0:T(1,128)}', space=vmem, size = 0x12000, scoped, tag = 'internal scratch']
  %s0 = inlined_call_operand.vmem [shape: f32[2,128], index: 0, kind: input, shape index: {}]
  %s1 = inlined_call_operand.hbm [shape: f32[2,128], index: 1, kind: output, shape index: {}]
  %s2 = sld [smem:[#allocation0]]
  $region14: #{token_classifier.3} parent=0
    _
  %s4 = ssub.s32 1, %s2
  %s5 = scalar_select 0, %s4, %s2
  $region1: #{token_classifier.3} parent=0
    #allocation2 [shape = 'u8[1024]{0}', space=vmem, size = 0x400, scoped, tag = 'output window, operand 0, single buffered']
    #allocation3 [shape = 's32[1]{0}', space=sflag, size = 0x4, scoped, tag = 'scoped memory for token_classifier.3']
    %6 = vsyncpa [#allocation3], 0
    // Predicated region
    $region2: #{token_classifier.3} parent=1 // pred_check
      _
    $region3: #{token_classifier.3} parent=1 // pred_check_branch
      %8 = sbr.rel (0) target = $region5
    $region4: #{token_classifier.3} parent=1 // pred_region
      _
    $region5: #{token_classifier.3} parent=1 // pred_fallthru
      _
    %v9 = vld [vmem:[%s0] sm:$0x3]
    %vm10 = vcmask 1041408
    %v11 = vsel %vm10, %v9, -inf
    %12 = vmax.xlane.f32.xlu0 %v11
    %v13 = vpop.xlane.xlu0 %12
    %v14 = vsub.f32 %v9, %v13
    %v15 = vmul.f32 %v14, 1.442695
    %v16 = vpow.pop %v15
    %v17 = vsel %vm10, %v16, 0.0
    %18 = vadd.xlane.f32.xlu0 %v17
    %v19 = vpop.xlane.xlu0 %18
    %v20 = vrcp.pop %v19
    %v21 = vmul.f32 %v16, %v20
    %22 = vst [vmem:[#allocation2] sm:$0x3] %v21
    // Predicated region
    $region6: #{token_classifier.3} parent=1 // pred_check
      _
    $region7: #{token_classifier.3} parent=1 // pred_check_branch
      %24 = sbr.rel (0) target = $region9
    $region8: #{token_classifier.3} parent=1 // pred_region
      %s26 = ssub.s32 32, 32
      %27 = vsyncadd [#allocation3], %s26
      %s29 = sshll.u32 [#allocation2], 4
      %s30 = int_to_ptr.vmem [resolvable:$true] %s29
      %32 = dma.vmem_to_hbm [thread:$0]  %s30, 32, %s1, [#allocation3]
    $region9: #{token_classifier.3} parent=1 // pred_fallthru
      _
    // Predicated region
    $region10: #{token_classifier.3} parent=1 // pred_check
      _
    $region11: #{token_classifier.3} parent=1 // pred_check_branch
      %34 = sbr.rel (0) target = $region13
    $region12: #{token_classifier.3} parent=1 // pred_region
      %35 = dma.done [#allocation3], 32
    $region13: #{token_classifier.3} parent=1 // pred_fallthru
      _
    %36 = vsyncpa [#allocation3], 1

// kernel: token_classifier.2
$region0: #{token_classifier.2}
  #allocation0 [shape = 'u32[]', space=smem, size = 0x4, offset = 0x4, fixed_abs, tag = 'smem constant byte address 0x4 - core index']
  #allocation1 [shape = 'u32[144,128]{1,0:T(1,128)}', space=vmem, size = 0x12000, scoped, tag = 'internal scratch']
  %s0 = inlined_call_operand.vmem [shape: bf16[2,256], index: 0, kind: input, shape index: {}]
  %s1 = inlined_call_operand.hbm [shape: bf16[256,128], index: 1, kind: input, shape index: {}]
  %s2 = inlined_call_operand.vmem [shape: f32[1,128], index: 2, kind: input, shape index: {}]
  %s3 = inlined_call_operand.vmem [shape: f32[2,128], index: 3, kind: output, shape index: {}]
  %s4 = sld [smem:[#allocation0]]
  $region34: #{token_classifier.2} parent=0
    _
  %s6 = ssub.s32 1, %s4
  %s7 = scalar_select 0, %s6, %s4
  $region1: #{token_classifier.2} parent=0
    #allocation2 [shape = 'u8[65536]{0}', space=vmem, size = 0x10000, scoped, tag = 'input window, operand 1, single buffered']
    #allocation3 [shape = 's32[1]{0}', space=sflag, size = 0x4, scoped, tag = 'scoped memory for token_classifier.2']
    %8 = vsyncpa [#allocation3], 0
    // Predicated region
    $region2: #{token_classifier.2} parent=1 // pred_check
      _
    $region3: #{token_classifier.2} parent=1 // pred_check_branch
      %10 = sbr.rel (0) target = $region5
    $region4: #{token_classifier.2} parent=1 // pred_region
      _
    $region5: #{token_classifier.2} parent=1 // pred_fallthru
      _
    // Predicated region
    $region6: #{token_classifier.2} parent=1 // pred_check
      _
    $region7: #{token_classifier.2} parent=1 // pred_check_branch
      %12 = sbr.rel (0) target = $region9
    $region8: #{token_classifier.2} parent=1 // pred_region
      %s14 = ssub.s32 2048, 2048
      %15 = vsyncadd [#allocation3], %s14
      %s16 = sshll.u32 [#allocation2], 4
      %s17 = int_to_ptr.vmem [resolvable:$true] %s16
      %22 = dma.hbm_to_vmem [thread:$0]  %s1, 2048, %s17, [#allocation3], 64, 64, 4
    $region9: #{token_classifier.2} parent=1 // pred_fallthru
      _
    // Predicated region
    $region10: #{token_classifier.2} parent=1 // pred_check
      _
    $region11: #{token_classifier.2} parent=1 // pred_check_branch
      %24 = sbr.rel (0) target = $region13
    $region12: #{token_classifier.2} parent=1 // pred_region
      _
    $region13: #{token_classifier.2} parent=1 // pred_fallthru
      _
    // Predicated region
    $region14: #{token_classifier.2} parent=1 // pred_check
      _
    $region15: #{token_classifier.2} parent=1 // pred_check_branch
      %26 = sbr.rel (0) target = $region17
    $region16: #{token_classifier.2} parent=1 // pred_region
      %27 = dma.done [#allocation3], 2048
    $region17: #{token_classifier.2} parent=1 // pred_fallthru
      _
    %s29 = smul.u32 0, 256
    %s30 = sshra.s32 %s29, 7
    %s31 = sand.u32 %s29, 127
    %s32 = scalar_lea.vmem %s0, %s30
    %v33 = vld [vmem:[%s32] sm:$0x3]
    %v34 = vld [vmem:[#allocation2] sm:$0xf]
    %v35 = vld [vmem:[#allocation2 + $0x4] sm:$0xf]
    %v36 = vld [vmem:[#allocation2 + $0x8] sm:$0xf]
    %v37 = vld [vmem:[#allocation2 + $0xc] sm:$0xf]
    %v38 = vld [vmem:[#allocation2 + $0x10] sm:$0xf]
    %v39 = vld [vmem:[#allocation2 + $0x14] sm:$0xf]
    %v40 = vld [vmem:[#allocation2 + $0x18] sm:$0xf]
    %v41 = vld [vmem:[#allocation2 + $0x1c] sm:$0xf]
    %v42 = vld [vmem:[#allocation2 + $0x20] sm:$0xf]
    %v43 = vld [vmem:[#allocation2 + $0x24] sm:$0xf]
    %v44 = vld [vmem:[#allocation2 + $0x28] sm:$0xf]
    %v45 = vld [vmem:[#allocation2 + $0x2c] sm:$0xf]
    %v46 = vld [vmem:[#allocation2 + $0x30] sm:$0xf]
    %v47 = vld [vmem:[#allocation2 + $0x34] sm:$0xf]
    %v48 = vld [vmem:[#allocation2 + $0x38] sm:$0xf]
    %v49 = vld [vmem:[#allocation2 + $0x3c] sm:$0xf]
    %v50 = vld [vmem:[#allocation2 + $0x40] sm:$0xf]
    %v51 = vld [vmem:[#allocation2 + $0x44] sm:$0xf]
    %v52 = vld [vmem:[#allocation2 + $0x48] sm:$0xf]
    %v53 = vld [vmem:[#allocation2 + $0x4c] sm:$0xf]
    %v54 = vld [vmem:[#allocation2 + $0x50] sm:$0xf]
    %v55 = vld [vmem:[#allocation2 + $0x54] sm:$0xf]
    %v56 = vld [vmem:[#allocation2 + $0x58] sm:$0xf]
    %v57 = vld [vmem:[#allocation2 + $0x5c] sm:$0xf]
    %v58 = vld [vmem:[#allocation2 + $0x60] sm:$0xf]
    %v59 = vld [vmem:[#allocation2 + $0x64] sm:$0xf]
    %v60 = vld [vmem:[#allocation2 + $0x68] sm:$0xf]
    %v61 = vld [vmem:[#allocation2 + $0x6c] sm:$0xf]
    %v62 = vld [vmem:[#allocation2 + $0x70] sm:$0xf]
    %v63 = vld [vmem:[#allocation2 + $0x74] sm:$0xf]
    %v64 = vld [vmem:[#allocation2 + $0x78] sm:$0xf]
    %v65 = vld [vmem:[#allocation2 + $0x7c] sm:$0xf]
    %v68 = vunpack.c.l.s4 1966171168
    %v69 = vunpack.c.0.s8 %v68
    %v70 = vlaneseq
    %v71 = vshrl.u32 %v70, 7
    %v72 = vsub.s32 %v69, %v71
    %v73 = vrot.slane %v33, %v72
    %v74 = vcombine.high %v73, %v73
    %v76 = vunpack.c.l.s4 1966171168
    %v77 = vunpack.c.0.s8 %v76
    %v78 = vlaneseq
    %v79 = vshrl.u32 %v78, 7
    %v80 = vsub.s32 %v77, %v79
    %v81 = vrot.slane %v73, %v80
    %v83 = vunpack.c.l.s4 1966171168
    %v84 = vunpack.c.0.s8 %v83
    %v85 = vlaneseq
    %v86 = vshrl.u32 %v85, 7
    %v87 = vsub.s32 %v84, %v86
    %v88 = vrot.slane %v74, %v87
    %v123 = vunpack.c.l.b16 %v34
    %v124 = vunpack.c.l.b16 %v35
    %v125 = vunpack.c.l.b16 %v36
    %v126 = vunpack.c.l.b16 %v37
    %v127 = vunpack.c.l.b16 %v38
    %v128 = vunpack.c.l.b16 %v39
    %v129 = vunpack.c.l.b16 %v40
    %v130 = vunpack.c.l.b16 %v41
    %v131 = vunpack.c.l.b16 %v42
    %v132 = vunpack.c.l.b16 %v43
    %v133 = vunpack.c.l.b16 %v44
    %v134 = vunpack.c.l.b16 %v45
    %v135 = vunpack.c.l.b16 %v46
    %v136 = vunpack.c.l.b16 %v47
    %v137 = vunpack.c.l.b16 %v48
    %v138 = vunpack.c.l.b16 %v49
    %v139 = vunpack.c.l.b16 %v50
    %v140 = vunpack.c.l.b16 %v51
    %v141 = vunpack.c.l.b16 %v52
    %v142 = vunpack.c.l.b16 %v53
    %v143 = vunpack.c.l.b16 %v54
    %v144 = vunpack.c.l.b16 %v55
    %v145 = vunpack.c.l.b16 %v56
    %v146 = vunpack.c.l.b16 %v57
    %v147 = vunpack.c.l.b16 %v58
    %v148 = vunpack.c.l.b16 %v59
    %v149 = vunpack.c.l.b16 %v60
    %v150 = vunpack.c.l.b16 %v61
    %v151 = vunpack.c.l.b16 %v62
    %v152 = vunpack.c.l.b16 %v63
    %v153 = vunpack.c.l.b16 %v64
    %v154 = vunpack.c.l.b16 %v65
    %v155 = vpack.c.b16 %v124, %v123
    %v156 = vpack.c.b16 %v126, %v125
    %v157 = vpack.c.b16 %v128, %v127
    %v158 = vpack.c.b16 %v130, %v129
    %v159 = vpack.c.b16 %v132, %v131
    %v160 = vpack.c.b16 %v134, %v133
    %v161 = vpack.c.b16 %v136, %v135
    %v162 = vpack.c.b16 %v138, %v137
    %v163 = vpack.c.b16 %v140, %v139
    %v164 = vpack.c.b16 %v142, %v141
    %v165 = vpack.c.b16 %v144, %v143
    %v166 = vpack.c.b16 %v146, %v145
    %v167 = vpack.c.b16 %v148, %v147
    %v168 = vpack.c.b16 %v150, %v149
    %v169 = vpack.c.b16 %v152, %v151
    %v170 = vpack.c.b16 %v154, %v153
    %187 = vmatprep.subr.bf16.mxu0 0
    %188 = vmatpush1.bf16.msra.mxu0 %v155
    %189 = vmatprep.subr.bf16.mxu0 0
    %190 = vmatpush1.bf16.msra.mxu0 %v156
    %191 = vmatprep.subr.bf16.mxu0 0
    %192 = vmatpush1.bf16.msra.mxu0 %v157
    %193 = vmatprep.subr.bf16.mxu0 0
    %194 = vmatpush1.bf16.msra.mxu0 %v158
    %195 = vmatprep.subr.bf16.mxu0 0
    %196 = vmatpush1.bf16.msra.mxu0 %v159
    %197 = vmatprep.subr.bf16.mxu0 0
    %198 = vmatpush1.bf16.msra.mxu0 %v160
    %199 = vmatprep.subr.bf16.mxu0 0
    %200 = vmatpush1.bf16.msra.mxu0 %v161
    %201 = vmatprep.subr.bf16.mxu0 0
    %202 = vmatpush1.bf16.msra.mxu0 %v162
    %203 = vmatprep.subr.bf16.mxu0 0
    %204 = vmatpush1.bf16.msra.mxu0 %v163
    %205 = vmatprep.subr.bf16.mxu0 0
    %206 = vmatpush1.bf16.msra.mxu0 %v164
    %207 = vmatprep.subr.bf16.mxu0 0
    %208 = vmatpush1.bf16.msra.mxu0 %v165
    %209 = vmatprep.subr.bf16.mxu0 0
    %210 = vmatpush1.bf16.msra.mxu0 %v166
    %211 = vmatprep.subr.bf16.mxu0 0
    %212 = vmatpush1.bf16.msra.mxu0 %v167
    %213 = vmatprep.subr.bf16.mxu0 0
    %214 = vmatpush1.bf16.msra.mxu0 %v168
    %215 = vmatprep.subr.bf16.mxu0 0
    %216 = vmatpush1.bf16.msra.mxu0 %v169
    %217 = vmatprep.subr.bf16.mxu0 0
    %218 = vmatpush1.bf16.msra.mxu0 %v170
    %219 = vmatprep.mubr.bf16.mxu0 %v88
    %220 = vmatmul.mubr.bf16.gmra.mrb[0].mxu0 %v81
    %v221 = vpop.f32.mrb[0].mxu0
    %v222 = vadd.f32 0.0, %v221
    %v223 = vpop.f32.mrb[0].mxu0
    %v224 = vpop.f32.mrb[0].mxu0
    %v225 = vpop.f32.mrb[0].mxu0
    %226 = vdwg.mxu0
    %p227 = scmp.eq.s32.totalorder 0, 0
    // Predicated region
    $region18: #{token_classifier.2} parent=1 // pred_check
      %p228 = pneg %p227
    $region19: #{token_classifier.2} parent=1 // pred_check_branch
      %230 = sbr.rel (%p228) target = $region21
    $region20: #{token_classifier.2} parent=1 // pred_region
      %v231 = vld [vmem:[%s2] sm:$0x1]
      %v233 = vlaneseq
      %v234 = vshrl.u32 %v233, 7
      %v235 = vsub.s32 0, %v234
      %v236 = vrot.slane %v231, %v235
      %v238 = vadd.f32 %v222, %v236
      %239 = vst [vmem:[%s3] sm:$0x3] %v238
    $region21: #{token_classifier.2} parent=1 // pred_fallthru
      _
    %p240 = scmp.gt.s32.totalorder 0, 0
    // Predicated region
    $region22: #{token_classifier.2} parent=1 // pred_check
      %p241 = pneg %p240
    $region23: #{token_classifier.2} parent=1 // pred_check_branch
      %243 = sbr.rel (%p241) target = $region25
    $region24: #{token_classifier.2} parent=1 // pred_region
      %v244 = vld [vmem:[%s3] sm:$0x3]
      %v245 = vadd.f32 %v244, %v222
      %246 = vst [vmem:[%s3] sm:$0x3] %v245
    $region25: #{token_classifier.2} parent=1 // pred_fallthru
      _
    // Predicated region
    $region26: #{token_classifier.2} parent=1 // pred_check
      _
    $region27: #{token_classifier.2} parent=1 // pred_check_branch
      %248 = sbr.rel (0) target = $region29
    $region28: #{token_classifier.2} parent=1 // pred_region
      _
    $region29: #{token_classifier.2} parent=1 // pred_fallthru
      _
    // Predicated region
    $region30: #{token_classifier.2} parent=1 // pred_check
      _
    $region31: #{token_classifier.2} parent=1 // pred_check_branch
      %250 = sbr.rel (0) target = $region33
    $region32: #{token_classifier.2} parent=1 // pred_region
      _
    $region33: #{token_classifier.2} parent=1 // pred_fallthru
      _
    %251 = vsyncpa [#allocation3], 1

</llo_original>
